<compile_context>
chip_gen: v6e
topology: v6e:2x2x1
jax: 0.10.0
libtpu: 0.0.40
codegen_flags: <defaults>
</compile_context>

<pallas_src>
import functools

import jax
import jax.numpy as jnp
from jax.experimental import pallas as pl
from jax.experimental.pallas import tpu as pltpu


_INV_SQRT2 = 0.7071067811865476
_SQRT_2_OVER_PI = 0.7978845608028654


def _round_up(x, m):
    return (x + m - 1) // m * m


def _head_transform_kernel(x_ref, w_ref, p_ref, o_ref, *, eps, approximate_gelu,
                           compute_dtype):
    x = x_ref[...]
    if compute_dtype is not None and x.dtype != jnp.dtype(compute_dtype):
        # In-kernel cast: the tile is already in VMEM, so this costs VALU only,
        # not an extra HBM read+write pass (which a wrapper-side astype would).
        x = x.astype(compute_dtype)

    # Dense: (tm, H) @ (H, H) on the MXU, f32 accumulation. Epilogue is f32.
    y = jnp.dot(x, w_ref[...], preferred_element_type=jnp.float32)

    bias = p_ref[0:1, :].astype(jnp.float32)
    gamma = p_ref[1:2, :].astype(jnp.float32)
    beta = p_ref[2:3, :].astype(jnp.float32)
    y = y + bias

    if approximate_gelu:
        # tanh approximation ("gelu_new") — tanh runs on the EUP slot.
        y = 0.5 * y * (1.0 + jnp.tanh(_SQRT_2_OVER_PI * (y + 0.044715 * y * y * y)))
    else:
        # exact erf GELU — matches torch.nn.functional.gelu / HF "gelu".
        y = 0.5 * y * (1.0 + jax.lax.erf(y * _INV_SQRT2))

    # Single-pass LayerNorm over the hidden (lane) axis with folded affine:
    #   out = y * (rsqrt(var+eps)*gamma) + (beta - mean*rsqrt(var+eps)*gamma)
    mean = jnp.mean(y, axis=-1, keepdims=True)
    mean_sq = jnp.mean(y * y, axis=-1, keepdims=True)
    var = jnp.maximum(mean_sq - mean * mean, 0.0)  # guard tiny cancellation
    inv = jax.lax.rsqrt(var + eps)
    scale = inv * gamma
    shift = beta - mean * scale
    # TODO(synk): if the bundle dump shows the f32 epilogue serialized after the
    # MXU pushes, split tm into 2-4 sub-chunks (lax.fori_loop unroll=True) and
    # overlap dot(chunk j+1) with the GELU+LN of chunk j.
    o_ref[...] = (y * scale + shift).astype(o_ref.dtype)


def _build_call(*, tm, hidden, tokens, out_dtype, eps, approximate_gelu,
                compute_dtype, vmem_limit_bytes):
    kernel = functools.partial(
        _head_transform_kernel, eps=eps, approximate_gelu=approximate_gelu,
        compute_dtype=compute_dtype)
    return pl.pallas_call(
        kernel,
        out_shape=jax.ShapeDtypeStruct((tokens, hidden), out_dtype),
        grid_spec=pltpu.PrefetchScalarGridSpec(
            num_scalar_prefetch=0,
            grid=(pl.cdiv(tokens, tm),),   # ragged last block masked by Pallas
            in_specs=[
                pl.BlockSpec((tm, hidden), lambda i: (i, 0)),        # x row tile
                pl.BlockSpec((hidden, hidden), lambda i: (0, 0)),    # full W, resident
                pl.BlockSpec((3, hidden), lambda i: (0, 0)),         # [bias; gamma; beta]
            ],
            out_specs=pl.BlockSpec((tm, hidden), lambda i: (i, 0)),
        ),
        compiler_params=pltpu.CompilerParams(
            # Token-tile axis is independent -> megacore split across v7x's 2 TCs.
            dimension_semantics=("parallel",),
            vmem_limit_bytes=vmem_limit_bytes,
        ),
    )


def _physical_vmem_bytes():
    info_fn = getattr(pltpu, "get_tpu_info", None)
    if info_fn is None:
        return None
    try:
        return int(info_fn().vmem_capacity_bytes)
    except Exception:  # capacity probe only; fall back to a conservative budget
        return None


def _vmem_estimate(tm, hidden, x_itemsize, w_itemsize, out_itemsize):
    est = (2 * tm * hidden * x_itemsize          # double-buffered input tiles
           + 2 * tm * hidden * out_itemsize      # double-buffered output tiles
           + 2 * hidden * hidden * w_itemsize    # resident W (2 bufs; re-DMA elided)
           + 2 * 3 * hidden * 4                  # packed bias/gamma/beta
           + 4 * tm * hidden * 4)                # f32 epilogue temporaries
    return int(est * 1.25)                       # headroom


def bert_prediction_head_transform(x, w, b, gamma, beta, *, eps=1e-12, tm=512,
                                   compute_dtype=None, out_dtype=None,
                                   approximate_gelu=False, vmem_limit_bytes=None):
    """Fused dense -> GELU -> LayerNorm (BertPredictionHeadTransform.forward).

    x: [tokens, H]; w: [H, H] already transposed to (in, out); b/gamma/beta: [H].
    compute_dtype: optional matmul operand dtype (e.g. jnp.bfloat16 — strongly
      recommended on v5e). W is pre-cast once in the wrapper; x is cast in-kernel.
      Accumulation and the GELU/LN epilogue stay f32.
    out_dtype: output dtype (default: x.dtype). Pass jnp.bfloat16 to halve the
      writeback traffic when the consumer accepts it.
    """
    tokens, hidden = x.shape
    out_dtype = jnp.dtype(x.dtype if out_dtype is None else out_dtype)

    mm_dtype = jnp.dtype(compute_dtype) if compute_dtype is not None else x.dtype
    if compute_dtype is not None:
        w = w.astype(mm_dtype)          # one-time parameter cast (wrapper side)
        if x.dtype == mm_dtype:
            compute_dtype = None        # no in-kernel cast needed

    # Row tile: multiple of the native sublane tiling (16 for packed bf16, 8 f32).
    row_align = 16 if mm_dtype.itemsize < 4 else 8
    tm = _round_up(max(tm, row_align), row_align)

    tm_eff = min(tm, _round_up(tokens, row_align))
    if tokens > row_align:
        # Keep >= 2 balanced grid steps so v7x's two TensorCores both get work
        # under dimension_semantics=("parallel",); no-op on single-TC v5e/v6e.
        tm_eff = min(tm_eff, _round_up(pl.cdiv(tokens, 2), row_align))
    tm_eff = max(tm_eff, row_align)

    # Generation-aware VMEM budget: physical capacity minus headroom (64 MiB/TC
    # on v7x, 128 MiB on v5e/v6e); shrink the row tile until the set fits.
    phys = _physical_vmem_bytes()
    cap = (phys - (8 << 20)) if phys is not None else (48 << 20)
    cap = max(cap, 16 << 20)
    sizes = (hidden, x.dtype.itemsize, w.dtype.itemsize, out_dtype.itemsize)
    while tm_eff > row_align and _vmem_estimate(tm_eff, *sizes) > cap:
        tm_eff = max(row_align, _round_up(tm_eff // 2, row_align))
    # TODO(synk): for very large H where even tm_eff=row_align + resident W
    # exceeds the budget, add a K-tiled accumulator variant.

    if vmem_limit_bytes is None:
        est = _vmem_estimate(tm_eff, *sizes)
        if est > (16 << 20):            # only raise above the conservative default
            vmem_limit_bytes = min(est, cap)

    params = jnp.stack([b.astype(jnp.float32),
                        gamma.astype(jnp.float32),
                        beta.astype(jnp.float32)], axis=0)   # (3, H) constant block

    call = _build_call(tm=tm_eff, hidden=hidden, tokens=tokens, out_dtype=out_dtype,
                       eps=eps, approximate_gelu=approximate_gelu,
                       compute_dtype=compute_dtype, vmem_limit_bytes=vmem_limit_bytes)
    # Ragged token counts: the last partial block is masked by Pallas on
    # writeback; no jnp.pad copy of the whole activation is made.
    return call(x, w, params)


def _reference(x, w, b, gamma, beta, eps=1e-12):
    y = x.astype(jnp.float32) @ w.astype(jnp.float32) + b
    y = 0.5 * y * (1.0 + jax.lax.erf(y * _INV_SQRT2))
    mean = jnp.mean(y, axis=-1, keepdims=True)
    var = jnp.mean((y - mean) ** 2, axis=-1, keepdims=True)
    return (y - mean) * jax.lax.rsqrt(var + eps) * gamma + beta


if __name__ == "__main__":
    key = jax.random.PRNGKey(0)
    batch, seq, hidden = 2, 8, 32
    eps = 1e-12

    k_x, k_w, k_b, k_g, k_beta = jax.random.split(key, 5)

    x = jax.random.normal(k_x, (batch, seq, hidden), dtype=jnp.float32)
    # nn.Linear weight is [out, in]; pass it transposed as [in, out].
    w_t = jax.random.normal(k_w, (hidden, hidden), dtype=jnp.float32) * (1.0 / jnp.sqrt(hidden))
    b = jax.random.normal(k_b, (hidden,), dtype=jnp.float32) * 0.02
    gamma = 1.0 + 0.1 * jax.random.normal(k_g, (hidden,), dtype=jnp.float32)
    beta = 0.1 * jax.random.normal(k_beta, (hidden,), dtype=jnp.float32)

    x2d = x.reshape(batch * seq, hidden)
    ref = _reference(x2d, w_t, b, gamma, beta, eps=eps)

    # 1) native-f32 path (exact semantics of the PyTorch module).
    out = bert_prediction_head_transform(x2d, w_t, b, gamma, beta, eps=eps)
    jax.block_until_ready(out)
    assert out.shape == (batch * seq, hidden)
    assert jnp.allclose(out, ref, atol=1e-4, rtol=1e-4), "f32 path mismatch vs reference"

    # 2) bf16-matmul / f32-accumulate production path (in-kernel activation cast).
    out_bf16 = bert_prediction_head_transform(
        x2d, w_t, b, gamma, beta, eps=eps, compute_dtype=jnp.bfloat16)
    jax.block_until_ready(out_bf16)
    assert jnp.allclose(out_bf16, ref, atol=2e-1, rtol=2e-1), "bf16 path mismatch vs reference"

    # 3) ragged token count (exercises the masked partial last block; no pad copy).
    t_odd = 13
    out_odd = bert_prediction_head_transform(x2d[:t_odd], w_t, b, gamma, beta, eps=eps)
    jax.block_until_ready(out_odd)
    assert out_odd.shape == (t_odd, hidden)
    assert jnp.allclose(out_odd, ref[:t_odd], atol=1e-4, rtol=1e-4), "ragged path mismatch"

    print("KERNEL_OK")
</pallas_src>

<mosaic_0001>
module attributes {stable_mosaic.version = 11 : i64} {
  func.func @_head_transform_kernel(%arg0: i32, %arg1: memref<8x32xf32, #tpu.memory_space<vmem>>, %arg2: memref<32x32xf32, #tpu.memory_space<vmem>>, %arg3: memref<3x32xf32, #tpu.memory_space<vmem>>, %arg4: memref<8x32xf32, #tpu.memory_space<vmem>>) attributes {dimension_semantics = [#tpu.dimension_semantics<parallel>], iteration_bounds = array<i64: 2>, scalar_prefetch = 0 : i64, scratch_operands = 0 : i64, tpu.core_type = #tpu.core_type<tc>, window_params = [{transform_indices = @transform_0, window_bounds = array<i64: 8, 32>}, {pipeline_mode = #tpu.pipeline_mode<synchronous>, transform_indices = @transform_1, window_bounds = array<i64: 32, 32>}, {pipeline_mode = #tpu.pipeline_mode<synchronous>, transform_indices = @transform_2, window_bounds = array<i64: 3, 32>}, {transform_indices = @transform_3, window_bounds = array<i64: 8, 32>}]} {
    %c0 = arith.constant 0 : index
    %c0_0 = arith.constant 0 : index
    %0 = vector.load %arg1[%c0, %c0_0] : memref<8x32xf32, #tpu.memory_space<vmem>>, vector<8x32xf32>
    %c0_1 = arith.constant 0 : index
    %c0_2 = arith.constant 0 : index
    %1 = vector.load %arg2[%c0_1, %c0_2] : memref<32x32xf32, #tpu.memory_space<vmem>>, vector<32x32xf32>
    %cst = arith.constant dense<0.000000e+00> : vector<8x32xf32>
    %2 = tpu.matmul %0, %1, %cst {dimension_numbers = #tpu.dot_dimension_numbers<[1], [0], [0], [1], [0, 0, 1, 1], [], []>} : vector<8x32xf32>, vector<32x32xf32>, vector<8x32xf32> -> vector<8x32xf32>
    %c0_3 = arith.constant 0 : index
    %c0_4 = arith.constant 0 : index
    %3 = vector.load %arg3[%c0_3, %c0_4] : memref<3x32xf32, #tpu.memory_space<vmem>>, vector<1x32xf32>
    %c1 = arith.constant 1 : index
    %c0_5 = arith.constant 0 : index
    %4 = vector.load %arg3[%c1, %c0_5] : memref<3x32xf32, #tpu.memory_space<vmem>>, vector<1x32xf32>
    %c2 = arith.constant 2 : index
    %c0_6 = arith.constant 0 : index
    %5 = vector.load %arg3[%c2, %c0_6] : memref<3x32xf32, #tpu.memory_space<vmem>>, vector<1x32xf32>
    %6 = vector.broadcast %3 : vector<1x32xf32> to vector<8x32xf32>
    %7 = arith.addf %2, %6 : vector<8x32xf32>
    %cst_7 = arith.constant 5.000000e-01 : f32
    %8 = vector.broadcast %cst_7 : f32 to vector<8x32xf32>
    %9 = arith.mulf %8, %7 : vector<8x32xf32>
    %cst_8 = arith.constant 0.707106769 : f32
    %10 = vector.broadcast %cst_8 : f32 to vector<8x32xf32>
    %11 = arith.mulf %7, %10 : vector<8x32xf32>
    %12 = math.erf %11 : vector<8x32xf32>
    %cst_9 = arith.constant 1.000000e+00 : f32
    %13 = vector.broadcast %cst_9 : f32 to vector<8x32xf32>
    %14 = arith.addf %13, %12 : vector<8x32xf32>
    %15 = arith.mulf %9, %14 : vector<8x32xf32>
    %cst_10 = arith.constant dense<0.000000e+00> : vector<8xf32>
    %16 = vector.multi_reduction <add>, %15, %cst_10 [1] : vector<8x32xf32> to vector<8xf32>
    %17 = vector.shape_cast %16 : vector<8xf32> to vector<8x1xf32>
    %cst_11 = arith.constant 3.200000e+01 : f32
    %18 = vector.broadcast %cst_11 : f32 to vector<8x1xf32>
    %19 = arith.divf %17, %18 : vector<8x1xf32>
    %20 = arith.mulf %15, %15 : vector<8x32xf32>
    %cst_12 = arith.constant dense<0.000000e+00> : vector<8xf32>
    %21 = vector.multi_reduction <add>, %20, %cst_12 [1] : vector<8x32xf32> to vector<8xf32>
    %22 = vector.shape_cast %21 : vector<8xf32> to vector<8x1xf32>
    %cst_13 = arith.constant 3.200000e+01 : f32
    %23 = vector.broadcast %cst_13 : f32 to vector<8x1xf32>
    %24 = arith.divf %22, %23 : vector<8x1xf32>
    %25 = arith.mulf %19, %19 : vector<8x1xf32>
    %26 = arith.subf %24, %25 : vector<8x1xf32>
    %cst_14 = arith.constant 0.000000e+00 : f32
    %27 = vector.broadcast %cst_14 : f32 to vector<8x1xf32>
    %28 = arith.maximumf %26, %27 : vector<8x1xf32>
    %cst_15 = arith.constant 9.99999996E-13 : f32
    %29 = vector.broadcast %cst_15 : f32 to vector<8x1xf32>
    %30 = arith.addf %28, %29 : vector<8x1xf32>
    %31 = math.rsqrt %30 : vector<8x1xf32>
    %32 = vector.broadcast %31 : vector<8x1xf32> to vector<8x32xf32>
    %33 = vector.broadcast %4 : vector<1x32xf32> to vector<8x32xf32>
    %34 = arith.mulf %32, %33 : vector<8x32xf32>
    %35 = vector.broadcast %19 : vector<8x1xf32> to vector<8x32xf32>
    %36 = arith.mulf %35, %34 : vector<8x32xf32>
    %37 = vector.broadcast %5 : vector<1x32xf32> to vector<8x32xf32>
    %38 = arith.subf %37, %36 : vector<8x32xf32>
    %39 = arith.mulf %15, %34 : vector<8x32xf32>
    %40 = arith.addf %39, %38 : vector<8x32xf32>
    %c0_16 = arith.constant 0 : index
    %c0_17 = arith.constant 0 : index
    %41 = vector.load %arg4[%c0_16, %c0_17] : memref<8x32xf32, #tpu.memory_space<vmem>>, vector<8x32xf32>
    tpu.vector_store %arg4[%c0_16, %c0_17], %40 {strides = array<i32>} : memref<8x32xf32, #tpu.memory_space<vmem>>, vector<8x32xf32>,
    return
  }
  func.func @transform_0(%arg0: i32) -> (i32, i32) {
    %c0_i32 = arith.constant 0 : i32
    %c0_i32_0 = arith.constant 0 : i32
    return %arg0, %c0_i32 : i32, i32
  }
  func.func @transform_1(%arg0: i32) -> (i32, i32) {
    %c0_i32 = arith.constant 0 : i32
    %c0_i32_0 = arith.constant 0 : i32
    %c0_i32_1 = arith.constant 0 : i32
    return %c0_i32, %c0_i32_0 : i32, i32
  }
  func.func @transform_2(%arg0: i32) -> (i32, i32) {
    %c0_i32 = arith.constant 0 : i32
    %c0_i32_0 = arith.constant 0 : i32
    %c0_i32_1 = arith.constant 0 : i32
    return %c0_i32, %c0_i32_0 : i32, i32
  }
  func.func @transform_3(%arg0: i32) -> (i32, i32) {
    %c0_i32 = arith.constant 0 : i32
    %c0_i32_0 = arith.constant 0 : i32
    return %arg0, %c0_i32 : i32, i32
  }
}

</mosaic_0001>

<llo_original>
// kernel: tpu_custom_call.1
$region0: #{tpu_custom_call.1}
  #allocation0 [shape = 'u32[]', space=smem, size = 0x4, offset = 0x4, fixed_abs, tag = 'smem constant byte address 0x4 - core index']
  #allocation1 [shape = 'u32[144,128]{1,0:T(1,128)}', space=vmem, size = 0x12000, scoped, tag = 'internal scratch']
  %s0 = inlined_call_operand.hbm [shape: f32[16,32], index: 0, kind: input, shape index: {}]
  %s1 = inlined_call_operand.hbm [shape: f32[32,32], index: 1, kind: input, shape index: {}]
  %s2 = inlined_call_operand.hbm [shape: f32[3,32], index: 2, kind: input, shape index: {}]
  %s3 = inlined_call_operand.hbm [shape: f32[16,32], index: 3, kind: output, shape index: {}]
  %s4 = sld [smem:[#allocation0]]
  $region57: #{tpu_custom_call.1} parent=0
    _
  %s6 = ssub.s32 1, %s4
  %s7 = scalar_select 0, %s6, %s4
  $region1: #{tpu_custom_call.1} parent=0
    #allocation2 [shape = 'u8[8192]{0}', space=vmem, size = 0x2000, scoped, tag = 'input window, operand 0']
    #allocation3 [shape = 's32[2]{0}', space=sflag, size = 0x8, scoped, tag = 'scoped memory for tpu_custom_call.1']
    #allocation4 [shape = 's32[2]{0}', space=sflag, size = 0x8, scoped, tag = 'scoped memory for tpu_custom_call.1']
    #allocation5 [shape = 'u8[16384]{0}', space=vmem, size = 0x4000, scoped, tag = 'input window, operand 1, single buffered']
    #allocation6 [shape = 's32[1]{0}', space=sflag, size = 0x4, scoped, tag = 'scoped memory for tpu_custom_call.1']
    #allocation7 [shape = 'u8[2048]{0}', space=vmem, size = 0x800, scoped, tag = 'input window, operand 2, single buffered']
    #allocation8 [shape = 'u8[8192]{0}', space=vmem, size = 0x2000, scoped, tag = 'output window, operand 0']
    %8 = vsyncpa [#allocation3], 0
    %s9 = scalar_lea.sflag [#allocation3], 1
    %10 = vsyncpa %s9, 0
    %11 = vsyncpa [#allocation6], 0
    %12 = vsyncpa [#allocation4], 0
    %s13 = scalar_lea.sflag [#allocation4], 1
    %14 = vsyncpa %s13, 0
    loop: start=0, step=1, limit=4
    $region2: #{tpu_custom_call.1} parent=1 // loop_pre_header
      _
    $region3: #{tpu_custom_call.1} parent=1 // loop_header
      %s16 = sphi 0, %s20
      %p17 = scmp.ge.s32.totalorder %s16, 4
      %s26 = sphi 0, %s28
      %s29 = sphi 0, %s26
      %s30 = sphi 0, %s29
      %s46 = sphi 0, %s30
      %s50 = sphi 0, %s50
      %s52 = sphi 0, %s50
      %s53 = sphi 0, %s52
      %s67 = sphi 0, %s53
      %s71 = sphi 0, %s71
      %s73 = sphi 0, %s71
      %s74 = sphi 0, %s73
      %s88 = sphi 0, %s74
      %s94 = sphi 0, %s96
      %s97 = sphi 0, %s94
      %s98 = sphi 0, %s97
      %s114 = sphi 0, %s98
    $region4: #{tpu_custom_call.1} parent=1 // loop_header_branch
      %19 = sbr.rel (%p17) target = $region8
    $region5: #{tpu_custom_call.1} parent=1 // loop_body
      %s21 = ssub.s32 %s16, 1
      %s22 = ssub.s32 %s16, 2
      %s23 = sadd.s32 %s16, 1
      %s24 = ssub.s32 %s16, %s23
      %p25 = scmp.eq.s32.totalorder %s24, 0
      %s27 = sadd.s32 %s26, 1
      %s28 = scalar_select %p25, %s26, %s27
      %p31 = pneg %p25
      %p32 = scmp.eq.s32.totalorder %s16, 1
      %p33 = por %p31, %p32
      %p34 = scmp.ne.s32.totalorder %s26, %s29
      %p35 = scmp.eq.s32.totalorder %s16, 0
      %p36 = por %p34, %p35
      %p37 = scmp.ne.s32.totalorder %s26, %s29
      %p38 = scmp.eq.s32.totalorder %s21, 1
      %p39 = por %p37, %p38
      %p40 = scmp.ne.s32.totalorder %s29, %s30
      %p41 = scmp.eq.s32.totalorder %s21, 0
      %p42 = por %p40, %p41
      %p43 = scmp.ne.s32.totalorder %s29, %s30
      %p44 = scmp.eq.s32.totalorder %s22, 1
      %p45 = por %p43, %p44
      %p47 = scmp.ne.s32.totalorder %s30, %s46
      %p48 = scmp.eq.s32.totalorder %s22, 0
      %p49 = por %p47, %p48
      %s51 = sadd.s32 %s50, 1
      %p54 = scmp.eq.s32.totalorder %s16, 1
      %p55 = scmp.ne.s32.totalorder %s50, %s52
      %p56 = scmp.eq.s32.totalorder %s16, 0
      %p57 = por %p55, %p56
      %p58 = scmp.ne.s32.totalorder %s50, %s52
      %p59 = scmp.eq.s32.totalorder %s21, 1
      %p60 = por %p58, %p59
      %p61 = scmp.ne.s32.totalorder %s52, %s53
      %p62 = scmp.eq.s32.totalorder %s21, 0
      %p63 = por %p61, %p62
      %p64 = scmp.ne.s32.totalorder %s52, %s53
      %p65 = scmp.eq.s32.totalorder %s22, 1
      %p66 = por %p64, %p65
      %p68 = scmp.ne.s32.totalorder %s53, %s67
      %p69 = scmp.eq.s32.totalorder %s22, 0
      %p70 = por %p68, %p69
      %s72 = sadd.s32 %s71, 1
      %p75 = scmp.eq.s32.totalorder %s16, 1
      %p76 = scmp.ne.s32.totalorder %s71, %s73
      %p77 = scmp.eq.s32.totalorder %s16, 0
      %p78 = por %p76, %p77
      %p79 = scmp.ne.s32.totalorder %s71, %s73
      %p80 = scmp.eq.s32.totalorder %s21, 1
      %p81 = por %p79, %p80
      %p82 = scmp.ne.s32.totalorder %s73, %s74
      %p83 = scmp.eq.s32.totalorder %s21, 0
      %p84 = por %p82, %p83
      %p85 = scmp.ne.s32.totalorder %s73, %s74
      %p86 = scmp.eq.s32.totalorder %s22, 1
      %p87 = por %p85, %p86
      %p89 = scmp.ne.s32.totalorder %s74, %s88
      %p90 = scmp.eq.s32.totalorder %s22, 0
      %p91 = por %p89, %p90
      %s92 = ssub.s32 %s16, %s23
      %p93 = scmp.eq.s32.totalorder %s92, 0
      %s95 = sadd.s32 %s94, 1
      %s96 = scalar_select %p93, %s94, %s95
      %p99 = pneg %p93
      %p100 = scmp.eq.s32.totalorder %s16, 1
      %p101 = por %p99, %p100
      %p102 = scmp.ne.s32.totalorder %s94, %s97
      %p103 = scmp.eq.s32.totalorder %s16, 0
      %p104 = por %p102, %p103
      %p105 = scmp.ne.s32.totalorder %s94, %s97
      %p106 = scmp.eq.s32.totalorder %s21, 1
      %p107 = por %p105, %p106
      %p108 = scmp.ne.s32.totalorder %s97, %s98
      %p109 = scmp.eq.s32.totalorder %s21, 0
      %p110 = por %p108, %p109
      %p111 = scmp.ne.s32.totalorder %s97, %s98
      %p112 = scmp.eq.s32.totalorder %s22, 1
      %p113 = por %p111, %p112
      %p115 = scmp.ne.s32.totalorder %s98, %s114
      %p116 = scmp.eq.s32.totalorder %s22, 0
      %p117 = por %p115, %p116
      %p118 = scmp.le.s32.totalorder 1, %s16
      %p119 = scmp.lt.s32.totalorder %s16, 3
      %p120 = pnand %p118, %p119
      %p121 = pneg %p120
      // Predicated region
      $region9: #{tpu_custom_call.1} parent=5 // pred_check
        _
      $region10: #{tpu_custom_call.1} parent=5 // pred_check_branch
        %123 = sbr.rel (%p120) target = $region12
      $region11: #{tpu_custom_call.1} parent=5 // pred_region
        %s124 = ssub.s32 %s16, 1
        // Predicated region
        $region13: #{tpu_custom_call.1} parent=11 // pred_check
          %p125 = pneg %p63
        $region14: #{tpu_custom_call.1} parent=11 // pred_check_branch
          %127 = sbr.rel (%p125) target = $region16
        $region15: #{tpu_custom_call.1} parent=11 // pred_region
          %s129 = ssub.s32 512, 512
          %130 = vsyncadd [#allocation6], %s129
          %s131 = sshll.u32 [#allocation5], 4
          %s132 = int_to_ptr.vmem [resolvable:$true] %s131
          %137 = dma.hbm_to_vmem [thread:$0]  %s1, 512, %s132, [#allocation6], 128, 128, 8
        $region16: #{tpu_custom_call.1} parent=11 // pred_fallthru
          _
        // Predicated region
        $region17: #{tpu_custom_call.1} parent=11 // pred_check
          %p138 = pneg %p84
        $region18: #{tpu_custom_call.1} parent=11 // pred_check_branch
          %140 = sbr.rel (%p138) target = $region20
        $region19: #{tpu_custom_call.1} parent=11 // pred_region
          %s142 = ssub.s32 64, 64
          %143 = vsyncadd [#allocation6], %s142
          %s145 = sshll.u32 [#allocation7], 4
          %s146 = int_to_ptr.vmem [resolvable:$true] %s145
          %148 = dma.hbm_to_vmem [thread:$0]  %s2, 64, %s146, [#allocation6]
        $region20: #{tpu_custom_call.1} parent=11 // pred_fallthru
          _
      $region12: #{tpu_custom_call.1} parent=5 // pred_fallthru
        _
      %p149 = scmp.lt.s32.totalorder %s16, 2
      // Predicated region
      $region21: #{tpu_custom_call.1} parent=5 // pred_check
        %p150 = pneg %p149
      $region22: #{tpu_custom_call.1} parent=5 // pred_check_branch
        %152 = sbr.rel (%p150) target = $region24
      $region23: #{tpu_custom_call.1} parent=5 // pred_region
        // Predicated region
        $region25: #{tpu_custom_call.1} parent=23 // pred_check
          %p153 = pneg %p36
        $region26: #{tpu_custom_call.1} parent=23 // pred_check_branch
          %155 = sbr.rel (%p153) target = $region28
        $region27: #{tpu_custom_call.1} parent=23 // pred_region
          %s156 = sand.u32 %s26, 1
          %s157 = scalar_lea.sflag [#allocation3], %s156
          %s158 = sand.u32 %s26, 1
          %s159 = smul.addr %s158, 8
          %s160 = scalar_lea.vmem [#allocation2], %s159
          %s162 = ssub.s32 128, 128
          %163 = vsyncadd %s157, %s162
          %s164 = smul.addr %s16, 128
          %s165 = scalar_lea.hbm %s0, %s164
          %s167 = sshll.u32 %s160, 4
          %s168 = int_to_ptr.vmem [resolvable:$true] %s167
          %170 = dma.hbm_to_vmem [thread:$0]  %s165, 128, %s168, %s157
        $region28: #{tpu_custom_call.1} parent=23 // pred_fallthru
          _
      $region24: #{tpu_custom_call.1} parent=5 // pred_fallthru
        _
      %p171 = scmp.le.s32.totalorder 1, %s16
      %p172 = scmp.lt.s32.totalorder %s16, 3
      %p173 = pnand %p171, %p172
      %p174 = pneg %p173
      // Predicated region
      $region29: #{tpu_custom_call.1} parent=5 // pred_check
        _
      $region30: #{tpu_custom_call.1} parent=5 // pred_check_branch
        %176 = sbr.rel (%p173) target = $region32
      $region31: #{tpu_custom_call.1} parent=5 // pred_region
        %s177 = ssub.s32 %s16, 1
        %s178 = sand.u32 %s29, 1
        %s179 = scalar_lea.sflag [#allocation3], %s178
        %s180 = sand.u32 %s29, 1
        %s181 = smul.addr %s180, 8
        %s182 = scalar_lea.vmem [#allocation2], %s181
        // Predicated region
        $region33: #{tpu_custom_call.1} parent=31 // pred_check
          %p183 = pneg %p42
        $region34: #{tpu_custom_call.1} parent=31 // pred_check_branch
          %185 = sbr.rel (%p183) target = $region36
        $region35: #{tpu_custom_call.1} parent=31 // pred_region
          %186 = dma.done %s179, 128
        $region36: #{tpu_custom_call.1} parent=31 // pred_fallthru
          _
        // Predicated region
        $region37: #{tpu_custom_call.1} parent=31 // pred_check
          %p187 = pneg %p63
        $region38: #{tpu_custom_call.1} parent=31 // pred_check_branch
          %189 = sbr.rel (%p187) target = $region40
        $region39: #{tpu_custom_call.1} parent=31 // pred_region
          %190 = dma.done [#allocation6], 512
        $region40: #{tpu_custom_call.1} parent=31 // pred_fallthru
          _
        // Predicated region
        $region41: #{tpu_custom_call.1} parent=31 // pred_check
          %p191 = pneg %p84
        $region42: #{tpu_custom_call.1} parent=31 // pred_check_branch
          %193 = sbr.rel (%p191) target = $region44
        $region43: #{tpu_custom_call.1} parent=31 // pred_region
          %194 = dma.done [#allocation6], 64
        $region44: #{tpu_custom_call.1} parent=31 // pred_fallthru
          _
        %s195 = sand.u32 %s29, 1
        %s196 = scalar_lea.sflag [#allocation3], %s195
        %s197 = sand.u32 %s29, 1
        %s198 = smul.addr %s197, 8
        %s199 = scalar_lea.vmem [#allocation2], %s198
        %p200 = pneg %p42
        %p201 = pneg %p39
        %p202 = pneg %p63
        %p203 = pneg %p60
        %p204 = pneg %p84
        %p205 = pneg %p81
        %p206 = pneg %p110
        %p207 = pneg %p107
        %s208 = sand.u32 %s97, 1
        %s209 = scalar_lea.sflag [#allocation4], %s208
        %s210 = sand.u32 %s97, 1
        %s211 = smul.addr %s210, 8
        %s212 = scalar_lea.vmem [#allocation8], %s211
        %v213 = vld [vmem:[%s182] sm:$0xff]
        %v214 = vld [vmem:[#allocation5] sm:$0xff]
        %v215 = vld [vmem:[#allocation5 + $0x8] sm:$0xff]
        %v216 = vld [vmem:[#allocation5 + $0x10] sm:$0xff]
        %v217 = vld [vmem:[#allocation5 + $0x18] sm:$0xff]
        %v218 = vld [vmem:[#allocation7] sm:$0x1]
        %v219 = vld [vmem:[#allocation7 + $0x1] sm:$0x1]
        %v220 = vld [vmem:[#allocation7 + $0x2] sm:$0x1]
        %v221 = vlaneseq
        %v222 = vshrl.u32 %v221, 7
        %v223 = vsub.s32 0, %v222
        %v224 = vrot.slane %v218, %v223
        %vm225 = vcmask 261120
        %v227 = vsel %vm225, %v213, 0
        %229 = vmatprep.subr.mxu0 0.0
        %230 = vmatpush1.msra.mxu0 0.0
        %231 = vmatprep.subr.mxu0 0.0
        %232 = vmatpush1.msra.mxu0 0.0
        %233 = vmatprep.subr.mxu0 0.0
        %234 = vmatpush1.msra.mxu0 0.0
        %235 = vmatprep.subr.mxu0 0.0
        %236 = vmatpush1.msra.mxu0 0.0
        %237 = vmatprep.subr.mxu0 0.0
        %238 = vmatpush1.msra.mxu0 0.0
        %239 = vmatprep.subr.mxu0 0.0
        %240 = vmatpush1.msra.mxu0 0.0
        %241 = vmatprep.subr.mxu0 0.0
        %242 = vmatpush1.msra.mxu0 0.0
        %243 = vmatprep.subr.mxu0 0.0
        %244 = vmatpush1.msra.mxu0 0.0
        %245 = vmatprep.subr.mxu0 0.0
        %246 = vmatpush1.msra.mxu0 0.0
        %247 = vmatprep.subr.mxu0 0.0
        %248 = vmatpush1.msra.mxu0 0.0
        %249 = vmatprep.subr.mxu0 0.0
        %250 = vmatpush1.msra.mxu0 0.0
        %251 = vmatprep.subr.mxu0 0.0
        %252 = vmatpush1.msra.mxu0 0.0
        %253 = vmatprep.subr.mxu0 0.0
        %254 = vmatpush1.msra.mxu0 %v217
        %255 = vmatprep.subr.mxu0 0.0
        %256 = vmatpush1.msra.mxu0 %v216
        %257 = vmatprep.subr.mxu0 0.0
        %258 = vmatpush1.msra.mxu0 %v215
        %259 = vmatprep.subr.mxu0 0.0
        %260 = vmatpush1.msra.mxu0 %v214
        %261 = vmatprep.subr.mxu0 0.0
        %262 = vmatpush2.msra.mxu0 0.0
        %263 = vmatprep.subr.mxu0 0.0
        %264 = vmatpush2.msra.mxu0 0.0
        %265 = vmatprep.subr.mxu0 0.0
        %266 = vmatpush2.msra.mxu0 0.0
        %267 = vmatprep.subr.mxu0 0.0
        %268 = vmatpush2.msra.mxu0 0.0
        %269 = vmatprep.subr.mxu0 0.0
        %270 = vmatpush2.msra.mxu0 0.0
        %271 = vmatprep.subr.mxu0 0.0
        %272 = vmatpush2.msra.mxu0 0.0
        %273 = vmatprep.subr.mxu0 0.0
        %274 = vmatpush2.msra.mxu0 0.0
        %275 = vmatprep.subr.mxu0 0.0
        %276 = vmatpush2.msra.mxu0 0.0
        %277 = vmatprep.subr.mxu0 0.0
        %278 = vmatpush2.msra.mxu0 0.0
        %279 = vmatprep.subr.mxu0 0.0
        %280 = vmatpush2.msra.mxu0 0.0
        %281 = vmatprep.subr.mxu0 0.0
        %282 = vmatpush2.msra.mxu0 0.0
        %283 = vmatprep.subr.mxu0 0.0
        %284 = vmatpush2.msra.mxu0 0.0
        %285 = vmatprep.subr.mxu0 0.0
        %286 = vmatpush2.msra.mxu0 0.0
        %287 = vmatprep.subr.mxu0 0.0
        %288 = vmatpush2.msra.mxu0 0.0
        %289 = vmatprep.subr.mxu0 0.0
        %290 = vmatpush2.msra.mxu0 0.0
        %291 = vmatprep.subr.mxu0 0.0
        %292 = vmatpush2.msra.mxu0 0.0
        %293 = vmatprep.mubr.f32.mxu0 0.0
        %294 = vmatmul.mubr.f32.gmra.mxu0 %v227
        %v295 = vpop.f32.mrf.mxu0
        %v296 = vadd.f32 %v224, %v295
        %v297 = vpop.f32.mrf.mxu0
        %298 = vdwg.mxu0
        %v299 = vmul.f32 %v296, 0.5
        %v300 = vmul.f32 %v296, 0.70710677
        %v301 = verf.f32.pop %v300
        %v302 = vadd.f32 %v301, 1.0
        %v303 = vmul.f32 %v299, %v302
        %v304 = vsel %vm225, %v303, 0.0
        %305 = vadd.xlane.f32.xlu0 %v304
        %v306 = vpop.xlane.xlu0 %305
        %v307 = vrcp.pop 32.0
        %v308 = vmul.f32 %v306, %v307
        %v309 = vmul.f32 %v303, %v303
        %v310 = vsel %vm225, %v309, 0.0
        %311 = vadd.xlane.f32.xlu0 %v310
        %v312 = vpop.xlane.xlu0 %311
        %v313 = vmul.f32 %v312, %v307
        %v314 = vmul.f32 %v308, %v308
        %v315 = vsub.f32 %v313, %v314
        %v316 = vmax.f32 %v315, 0.0
        %v317 = vadd.f32 %v316, 1e-12
        %v318 = vrsqrt.pop %v317
        %v319 = vlaneseq
        %v320 = vshrl.u32 %v319, 7
        %v321 = vsub.s32 0, %v320
        %v322 = vrot.slane %v219, %v321
        %v323 = vmul.f32 %v318, %v322
        %v324 = vmul.f32 %v308, %v323
        %v325 = vlaneseq
        %v326 = vshrl.u32 %v325, 7
        %v327 = vsub.s32 0, %v326
        %v328 = vrot.slane %v220, %v327
        %v329 = vsub.f32 %v328, %v324
        %v330 = vmul.f32 %v303, %v323
        %v331 = vadd.f32 %v330, %v329
        %332 = vst.msk [vmem:[%s212] sm:$0xff] %vm225, %v331
        %s333 = sand.u32 %s97, 1
        %s334 = scalar_lea.sflag [#allocation4], %s333
        %s335 = sand.u32 %s97, 1
        %s336 = smul.addr %s335, 8
        %s337 = scalar_lea.vmem [#allocation8], %s336
        // Predicated region
        $region45: #{tpu_custom_call.1} parent=31 // pred_check
          %p338 = pneg %p107
        $region46: #{tpu_custom_call.1} parent=31 // pred_check_branch
          %340 = sbr.rel (%p338) target = $region48
        $region47: #{tpu_custom_call.1} parent=31 // pred_region
          %s342 = ssub.s32 128, 128
          %343 = vsyncadd %s334, %s342
          %s344 = smul.addr %s21, 128
          %s345 = scalar_lea.hbm %s3, %s344
          %s347 = sshll.u32 %s337, 4
          %s348 = int_to_ptr.vmem [resolvable:$true] %s347
          %350 = dma.vmem_to_hbm [thread:$0]  %s348, 128, %s345, %s334
        $region48: #{tpu_custom_call.1} parent=31 // pred_fallthru
          _
      $region32: #{tpu_custom_call.1} parent=5 // pred_fallthru
        _
      %p351 = scmp.le.s32.totalorder 2, %s16
      // Predicated region
      $region49: #{tpu_custom_call.1} parent=5 // pred_check
        %p352 = pneg %p351
      $region50: #{tpu_custom_call.1} parent=5 // pred_check_branch
        %354 = sbr.rel (%p352) target = $region52
      $region51: #{tpu_custom_call.1} parent=5 // pred_region
        %s355 = ssub.s32 %s16, 2
        // Predicated region
        $region53: #{tpu_custom_call.1} parent=51 // pred_check
          %p356 = pneg %p113
        $region54: #{tpu_custom_call.1} parent=51 // pred_check_branch
          %358 = sbr.rel (%p356) target = $region56
        $region55: #{tpu_custom_call.1} parent=51 // pred_region
          %s359 = sand.u32 %s98, 1
          %s360 = scalar_lea.sflag [#allocation4], %s359
          %s361 = sand.u32 %s98, 1
          %s362 = smul.addr %s361, 8
          %s363 = scalar_lea.vmem [#allocation8], %s362
          %364 = dma.done %s360, 128
        $region56: #{tpu_custom_call.1} parent=51 // pred_fallthru
          _
      $region52: #{tpu_custom_call.1} parent=5 // pred_fallthru
        _
    $region6: #{tpu_custom_call.1} parent=1 // loop_footer
      %s20 = sadd.s32 1, %s16
    $region7: #{tpu_custom_call.1} parent=1 // loop_footer_branch
      %15 = sbr.rel target = $region3
    $region8: #{tpu_custom_call.1} parent=1 // loop_exit
      _
    %365 = vsyncpa [#allocation3], 1
    %s366 = scalar_lea.sflag [#allocation3], 1
    %367 = vsyncpa %s366, 1
    %368 = vsyncpa [#allocation6], 1
    %369 = vsyncpa [#allocation4], 1
    %s370 = scalar_lea.sflag [#allocation4], 1
    %371 = vsyncpa %s370, 1

</llo_original>
